<compile_context>
chip_gen: v6e
topology: v6e:2x2x1
jax: 0.10.0
libtpu: 0.0.40
codegen_flags: <defaults>
</compile_context>

<pallas_src>
import functools

import jax
import jax.numpy as jnp
from jax.experimental import pallas as pl
from jax.experimental.pallas import tpu as pltpu


def dwconv3x3_kernel(x_ref, w_ref, b_ref, o_ref, xpad_ref, *, H, W, C):
    """One batch-group of a depthwise 3x3 conv (stride 1, pad 1).

    Folded layout: lane index l = j*C + c (j = column, c = channel).

    x_ref    : (Bb, H, W*C)          unpadded input block
    w_ref    : (9, W*C)              taps, row k = kh*3 + kw, tiled across W
    b_ref    : (1, W*C)              bias, tiled across W
    o_ref    : (Bb, H, W*C)          output block
    xpad_ref : (Bb, H+2, W*C + 2*C)  VMEM scratch: zero-padded input tile
    """
    Bb = x_ref.shape[0]
    WC = W * C
    f32 = jnp.float32

    # ---- in-kernel halo: zero borders, copy interior (no host-side pad). ----
    # Borders are re-zeroed every step so the persistent scratch never carries
    # stale data across grid steps / per-core shards.
    xpad_ref[:, 0:1, :] = jnp.zeros((Bb, 1, WC + 2 * C), f32)
    xpad_ref[:, H + 1:H + 2, :] = jnp.zeros((Bb, 1, WC + 2 * C), f32)
    xpad_ref[:, :, 0:C] = jnp.zeros((Bb, H + 2, C), f32)
    xpad_ref[:, :, WC + C:WC + 2 * C] = jnp.zeros((Bb, H + 2, C), f32)
    xpad_ref[:, 1:H + 1, C:C + WC] = x_ref[...].astype(f32)

    # ---- per-channel taps / bias, hoisted above the spatial loop. -----------
    w = w_ref[...].astype(f32)                      # (9, WC)
    taps = [w[k:k + 1, :] for k in range(9)]        # each (1, WC)
    bias = b_ref[...].astype(f32)                   # (1, WC)

    # ---- strip-wise accumulation: acc in vregs, one store per 8-row strip. --
    # Output row i reads padded rows i+kh (kh in 0..2) and padded lanes
    # l + kw*C (kw in 0..2) of the scratch.
    for h0 in range(0, H, 8):
        S = min(8, H - h0)
        acc = None
        for kh in range(3):
            for kw in range(3):
                blk = xpad_ref[:, h0 + kh:h0 + kh + S, kw * C:kw * C + WC]
                t = blk * taps[kh * 3 + kw]
                acc = t if acc is None else acc + t
        acc = acc + bias
        o_ref[:, h0:h0 + S, :] = acc.astype(o_ref.dtype)


def dwconv_forward(x_bnc, w_c133, bias_c, H, W):
    """x_bnc: (B, N=H*W, C) f32; w_c133: (C, 1, 3, 3); bias_c: (C,)."""
    B, N, C = x_bnc.shape
    assert N == H * W
    WC = W * C

    # (B, N, C) -> (B, H, W*C): contiguous reshape, no data movement; the lane
    # axis becomes (W, C) folded, dense even for small C.
    x_f = x_bnc.reshape(B, H, WC)

    # Depthwise weight (C, 1, 3, 3) -> (9, C) with row k = kh*3 + kw, then
    # tiled across W so that lane l = j*C + c carries w[k, c].  Tiny host op.
    w_taps = jnp.transpose(w_c133.reshape(C, 9), (1, 0))        # (9, C)
    w_f = jnp.tile(w_taps, (1, W))                               # (9, W*C)
    b_f = jnp.tile(bias_c.reshape(1, C), (1, W))                 # (1, W*C)

    # Batch grouping: biggest group whose double-buffered in/out blocks plus
    # padded scratch fit a conservative (v7x-safe) budget, while keeping at
    # least 2 grid steps so the pipeline / megacore sharding can engage.
    img_bytes = H * WC * 4
    pad_bytes = (H + 2) * (WC + 2 * C) * 4
    per_img = 4 * img_bytes + pad_bytes            # 2x-buffered in + out + scratch
    budget = 8 * 1024 * 1024
    Bb = max(1, min(B, budget // max(per_img, 1)))
    if B >= 2:
        Bb = max(1, min(Bb, B // 2))
    while B % Bb:
        Bb -= 1
    grid = (B // Bb,)

    vmem_need = Bb * per_img + 16 * WC * 4
    vmem_limit = int(min(64 * 1024 * 1024, max(16 * 1024 * 1024, 2 * vmem_need)))

    flops = B * H * W * C * (2 * 9 + 1)
    bytes_accessed = 4 * (B * H * WC            # activations in (unpadded)
                          + B * H * WC          # activations out
                          + 10 * WC)            # resident taps + bias (once)

    kernel = functools.partial(dwconv3x3_kernel, H=H, W=W, C=C)

    out_f = pl.pallas_call(
        kernel,
        out_shape=jax.ShapeDtypeStruct((B, H, WC), x_bnc.dtype),
        grid_spec=pltpu.PrefetchScalarGridSpec(
            num_scalar_prefetch=0,
            grid=grid,
            in_specs=[
                pl.BlockSpec((Bb, H, WC), lambda b: (b, 0, 0)),
                pl.BlockSpec((9, WC), lambda b: (0, 0)),   # resident weights
                pl.BlockSpec((1, WC), lambda b: (0, 0)),   # resident bias
            ],
            out_specs=pl.BlockSpec((Bb, H, WC), lambda b: (b, 0, 0)),
            scratch_shapes=[pltpu.VMEM((Bb, H + 2, WC + 2 * C), jnp.float32)],
        ),
        compiler_params=pltpu.CompilerParams(
            dimension_semantics=("parallel",),
            vmem_limit_bytes=vmem_limit,
        ),
        cost_estimate=pl.CostEstimate(
            flops=flops, transcendentals=0, bytes_accessed=bytes_accessed
        ),
    )(x_f, w_f, b_f)

    # (B, H, W*C) -> (B, N, C): free contiguous reshape back to token layout.
    return out_f.reshape(B, N, C)


def reference_forward(x_bnc, w_c133, bias_c, H, W):
    """Pure-JAX reference matching PyTorch DWConv.forward."""
    B, N, C = x_bnc.shape
    x_nchw = jnp.transpose(x_bnc, (0, 2, 1)).reshape(B, C, H, W)
    y = jax.lax.conv_general_dilated(
        x_nchw,
        w_c133,
        window_strides=(1, 1),
        padding=((1, 1), (1, 1)),
        dimension_numbers=("NCHW", "OIHW", "NCHW"),
        feature_group_count=C,
        precision=jax.lax.Precision.HIGHEST,
    )
    y = y + bias_c.reshape(1, C, 1, 1)
    return jnp.transpose(y.reshape(B, C, H * W), (0, 2, 1))


if __name__ == "__main__":
    key = jax.random.PRNGKey(0)
    k_x, k_w, k_b = jax.random.split(key, 3)

    B, C, H, W = 2, 32, 16, 16
    N = H * W

    x = jax.random.normal(k_x, (B, N, C), dtype=jnp.float32)
    # nn.Conv2d(dim, dim, 3, 1, 1, groups=dim): weight (C, 1, 3, 3), bias (C,)
    w = jax.random.normal(k_w, (C, 1, 3, 3), dtype=jnp.float32) * 0.1
    bias = jax.random.normal(k_b, (C,), dtype=jnp.float32) * 0.1

    out = jax.block_until_ready(dwconv_forward(x, w, bias, H, W))

    ref = reference_forward(x, w, bias, H, W)
    assert out.shape == (B, N, C)
    assert jnp.allclose(out, ref, atol=1e-4, rtol=1e-4), "mismatch vs reference"

    print("KERNEL_OK")
</pallas_src>

<mosaic_0001>
module attributes {stable_mosaic.version = 11 : i64} {
  func.func @dwconv3x3_kernel(%arg0: i32, %arg1: memref<1x16x512xf32, #tpu.memory_space<vmem>>, %arg2: memref<9x512xf32, #tpu.memory_space<vmem>>, %arg3: memref<1x512xf32, #tpu.memory_space<vmem>>, %arg4: memref<1x16x512xf32, #tpu.memory_space<vmem>>, %arg5: memref<1x18x576xf32, #tpu.memory_space<vmem>>) attributes {dimension_semantics = [#tpu.dimension_semantics<parallel>], iteration_bounds = array<i64: 2>, scalar_prefetch = 0 : i64, scratch_operands = 1 : i64, tpu.core_type = #tpu.core_type<tc>, window_params = [{transform_indices = @transform_0, window_bounds = array<i64: 1, 16, 512>}, {pipeline_mode = #tpu.pipeline_mode<synchronous>, transform_indices = @transform_1, window_bounds = array<i64: 9, 512>}, {pipeline_mode = #tpu.pipeline_mode<synchronous>, transform_indices = @transform_2, window_bounds = array<i64: 1, 512>}, {transform_indices = @transform_3, window_bounds = array<i64: 1, 16, 512>}]} {
    %cst = arith.constant 0.000000e+00 : f32
    %0 = vector.broadcast %cst : f32 to vector<1x1x576xf32>
    %c0 = arith.constant 0 : index
    %c0_0 = arith.constant 0 : index
    %c0_1 = arith.constant 0 : index
    %1 = vector.load %arg5[%c0, %c0_0, %c0_1] : memref<1x18x576xf32, #tpu.memory_space<vmem>>, vector<1x1x576xf32>
    tpu.vector_store %arg5[%c0, %c0_0, %c0_1], %0 {strides = array<i32>} : memref<1x18x576xf32, #tpu.memory_space<vmem>>, vector<1x1x576xf32>,
    %cst_2 = arith.constant 0.000000e+00 : f32
    %2 = vector.broadcast %cst_2 : f32 to vector<1x1x576xf32>
    %c0_3 = arith.constant 0 : index
    %c17 = arith.constant 17 : index
    %c0_4 = arith.constant 0 : index
    %3 = vector.load %arg5[%c0_3, %c17, %c0_4] : memref<1x18x576xf32, #tpu.memory_space<vmem>>, vector<1x1x576xf32>
    tpu.vector_store %arg5[%c0_3, %c17, %c0_4], %2 {strides = array<i32>} : memref<1x18x576xf32, #tpu.memory_space<vmem>>, vector<1x1x576xf32>,
    %cst_5 = arith.constant 0.000000e+00 : f32
    %4 = vector.broadcast %cst_5 : f32 to vector<1x18x32xf32>
    %c0_6 = arith.constant 0 : index
    %c0_7 = arith.constant 0 : index
    %c0_8 = arith.constant 0 : index
    %5 = vector.load %arg5[%c0_6, %c0_7, %c0_8] : memref<1x18x576xf32, #tpu.memory_space<vmem>>, vector<1x18x32xf32>
    tpu.vector_store %arg5[%c0_6, %c0_7, %c0_8], %4 {strides = array<i32>} : memref<1x18x576xf32, #tpu.memory_space<vmem>>, vector<1x18x32xf32>,
    %cst_9 = arith.constant 0.000000e+00 : f32
    %6 = vector.broadcast %cst_9 : f32 to vector<1x18x32xf32>
    %c0_10 = arith.constant 0 : index
    %c0_11 = arith.constant 0 : index
    %c544 = arith.constant 544 : index
    %7 = vector.load %arg5[%c0_10, %c0_11, %c544] : memref<1x18x576xf32, #tpu.memory_space<vmem>>, vector<1x18x32xf32>
    tpu.vector_store %arg5[%c0_10, %c0_11, %c544], %6 {strides = array<i32>} : memref<1x18x576xf32, #tpu.memory_space<vmem>>, vector<1x18x32xf32>,
    %c0_12 = arith.constant 0 : index
    %c0_13 = arith.constant 0 : index
    %c0_14 = arith.constant 0 : index
    %8 = vector.load %arg1[%c0_12, %c0_13, %c0_14] : memref<1x16x512xf32, #tpu.memory_space<vmem>>, vector<1x16x512xf32>
    %c0_15 = arith.constant 0 : index
    %c1 = arith.constant 1 : index
    %c32 = arith.constant 32 : index
    %9 = vector.load %arg5[%c0_15, %c1, %c32] : memref<1x18x576xf32, #tpu.memory_space<vmem>>, vector<1x16x512xf32>
    tpu.vector_store %arg5[%c0_15, %c1, %c32], %8 {strides = array<i32>} : memref<1x18x576xf32, #tpu.memory_space<vmem>>, vector<1x16x512xf32>,
    %c0_16 = arith.constant 0 : index
    %c0_17 = arith.constant 0 : index
    %10 = vector.load %arg2[%c0_16, %c0_17] : memref<9x512xf32, #tpu.memory_space<vmem>>, vector<9x512xf32>
    %11 = vector.extract_strided_slice %10 {offsets = [0, 0], sizes = [1, 512], strides = [1, 1]} : vector<9x512xf32> to vector<1x512xf32>
    %12 = vector.extract_strided_slice %10 {offsets = [1, 0], sizes = [1, 512], strides = [1, 1]} : vector<9x512xf32> to vector<1x512xf32>
    %13 = vector.extract_strided_slice %10 {offsets = [2, 0], sizes = [1, 512], strides = [1, 1]} : vector<9x512xf32> to vector<1x512xf32>
    %14 = vector.extract_strided_slice %10 {offsets = [3, 0], sizes = [1, 512], strides = [1, 1]} : vector<9x512xf32> to vector<1x512xf32>
    %15 = vector.extract_strided_slice %10 {offsets = [4, 0], sizes = [1, 512], strides = [1, 1]} : vector<9x512xf32> to vector<1x512xf32>
    %16 = vector.extract_strided_slice %10 {offsets = [5, 0], sizes = [1, 512], strides = [1, 1]} : vector<9x512xf32> to vector<1x512xf32>
    %17 = vector.extract_strided_slice %10 {offsets = [6, 0], sizes = [1, 512], strides = [1, 1]} : vector<9x512xf32> to vector<1x512xf32>
    %18 = vector.extract_strided_slice %10 {offsets = [7, 0], sizes = [1, 512], strides = [1, 1]} : vector<9x512xf32> to vector<1x512xf32>
    %19 = vector.extract_strided_slice %10 {offsets = [8, 0], sizes = [1, 512], strides = [1, 1]} : vector<9x512xf32> to vector<1x512xf32>
    %c0_18 = arith.constant 0 : index
    %c0_19 = arith.constant 0 : index
    %20 = vector.load %arg3[%c0_18, %c0_19] : memref<1x512xf32, #tpu.memory_space<vmem>>, vector<1x512xf32>
    %c0_20 = arith.constant 0 : index
    %c0_21 = arith.constant 0 : index
    %c0_22 = arith.constant 0 : index
    %21 = vector.load %arg5[%c0_20, %c0_21, %c0_22] : memref<1x18x576xf32, #tpu.memory_space<vmem>>, vector<1x8x512xf32>
    %22 = vector.shape_cast %11 : vector<1x512xf32> to vector<1x1x512xf32>
    %23 = vector.broadcast %22 : vector<1x1x512xf32> to vector<1x8x512xf32>
    %24 = arith.mulf %21, %23 : vector<1x8x512xf32>
    %c0_23 = arith.constant 0 : index
    %c0_24 = arith.constant 0 : index
    %c32_25 = arith.constant 32 : index
    %25 = vector.load %arg5[%c0_23, %c0_24, %c32_25] : memref<1x18x576xf32, #tpu.memory_space<vmem>>, vector<1x8x512xf32>
    %26 = vector.shape_cast %12 : vector<1x512xf32> to vector<1x1x512xf32>
    %27 = vector.broadcast %26 : vector<1x1x512xf32> to vector<1x8x512xf32>
    %28 = arith.mulf %25, %27 : vector<1x8x512xf32>
    %29 = arith.addf %24, %28 : vector<1x8x512xf32>
    %c0_26 = arith.constant 0 : index
    %c0_27 = arith.constant 0 : index
    %c64 = arith.constant 64 : index
    %30 = vector.load %arg5[%c0_26, %c0_27, %c64] : memref<1x18x576xf32, #tpu.memory_space<vmem>>, vector<1x8x512xf32>
    %31 = vector.shape_cast %13 : vector<1x512xf32> to vector<1x1x512xf32>
    %32 = vector.broadcast %31 : vector<1x1x512xf32> to vector<1x8x512xf32>
    %33 = arith.mulf %30, %32 : vector<1x8x512xf32>
    %34 = arith.addf %29, %33 : vector<1x8x512xf32>
    %c0_28 = arith.constant 0 : index
    %c1_29 = arith.constant 1 : index
    %c0_30 = arith.constant 0 : index
    %35 = vector.load %arg5[%c0_28, %c1_29, %c0_30] : memref<1x18x576xf32, #tpu.memory_space<vmem>>, vector<1x8x512xf32>
    %36 = vector.shape_cast %14 : vector<1x512xf32> to vector<1x1x512xf32>
    %37 = vector.broadcast %36 : vector<1x1x512xf32> to vector<1x8x512xf32>
    %38 = arith.mulf %35, %37 : vector<1x8x512xf32>
    %39 = arith.addf %34, %38 : vector<1x8x512xf32>
    %c0_31 = arith.constant 0 : index
    %c1_32 = arith.constant 1 : index
    %c32_33 = arith.constant 32 : index
    %40 = vector.load %arg5[%c0_31, %c1_32, %c32_33] : memref<1x18x576xf32, #tpu.memory_space<vmem>>, vector<1x8x512xf32>
    %41 = vector.shape_cast %15 : vector<1x512xf32> to vector<1x1x512xf32>
    %42 = vector.broadcast %41 : vector<1x1x512xf32> to vector<1x8x512xf32>
    %43 = arith.mulf %40, %42 : vector<1x8x512xf32>
    %44 = arith.addf %39, %43 : vector<1x8x512xf32>
    %c0_34 = arith.constant 0 : index
    %c1_35 = arith.constant 1 : index
    %c64_36 = arith.constant 64 : index
    %45 = vector.load %arg5[%c0_34, %c1_35, %c64_36] : memref<1x18x576xf32, #tpu.memory_space<vmem>>, vector<1x8x512xf32>
    %46 = vector.shape_cast %16 : vector<1x512xf32> to vector<1x1x512xf32>
    %47 = vector.broadcast %46 : vector<1x1x512xf32> to vector<1x8x512xf32>
    %48 = arith.mulf %45, %47 : vector<1x8x512xf32>
    %49 = arith.addf %44, %48 : vector<1x8x512xf32>
    %c0_37 = arith.constant 0 : index
    %c2 = arith.constant 2 : index
    %c0_38 = arith.constant 0 : index
    %50 = vector.load %arg5[%c0_37, %c2, %c0_38] : memref<1x18x576xf32, #tpu.memory_space<vmem>>, vector<1x8x512xf32>
    %51 = vector.shape_cast %17 : vector<1x512xf32> to vector<1x1x512xf32>
    %52 = vector.broadcast %51 : vector<1x1x512xf32> to vector<1x8x512xf32>
    %53 = arith.mulf %50, %52 : vector<1x8x512xf32>
    %54 = arith.addf %49, %53 : vector<1x8x512xf32>
    %c0_39 = arith.constant 0 : index
    %c2_40 = arith.constant 2 : index
    %c32_41 = arith.constant 32 : index
    %55 = vector.load %arg5[%c0_39, %c2_40, %c32_41] : memref<1x18x576xf32, #tpu.memory_space<vmem>>, vector<1x8x512xf32>
    %56 = vector.shape_cast %18 : vector<1x512xf32> to vector<1x1x512xf32>
    %57 = vector.broadcast %56 : vector<1x1x512xf32> to vector<1x8x512xf32>
    %58 = arith.mulf %55, %57 : vector<1x8x512xf32>
    %59 = arith.addf %54, %58 : vector<1x8x512xf32>
    %c0_42 = arith.constant 0 : index
    %c2_43 = arith.constant 2 : index
    %c64_44 = arith.constant 64 : index
    %60 = vector.load %arg5[%c0_42, %c2_43, %c64_44] : memref<1x18x576xf32, #tpu.memory_space<vmem>>, vector<1x8x512xf32>
    %61 = vector.shape_cast %19 : vector<1x512xf32> to vector<1x1x512xf32>
    %62 = vector.broadcast %61 : vector<1x1x512xf32> to vector<1x8x512xf32>
    %63 = arith.mulf %60, %62 : vector<1x8x512xf32>
    %64 = arith.addf %59, %63 : vector<1x8x512xf32>
    %65 = vector.shape_cast %20 : vector<1x512xf32> to vector<1x1x512xf32>
    %66 = vector.broadcast %65 : vector<1x1x512xf32> to vector<1x8x512xf32>
    %67 = arith.addf %64, %66 : vector<1x8x512xf32>
    %c0_45 = arith.constant 0 : index
    %c0_46 = arith.constant 0 : index
    %c0_47 = arith.constant 0 : index
    %68 = vector.load %arg4[%c0_45, %c0_46, %c0_47] : memref<1x16x512xf32, #tpu.memory_space<vmem>>, vector<1x8x512xf32>
    tpu.vector_store %arg4[%c0_45, %c0_46, %c0_47], %67 {strides = array<i32>} : memref<1x16x512xf32, #tpu.memory_space<vmem>>, vector<1x8x512xf32>,
    %c0_48 = arith.constant 0 : index
    %c8 = arith.constant 8 : index
    %c0_49 = arith.constant 0 : index
    %69 = vector.load %arg5[%c0_48, %c8, %c0_49] : memref<1x18x576xf32, #tpu.memory_space<vmem>>, vector<1x8x512xf32>
    %70 = vector.shape_cast %11 : vector<1x512xf32> to vector<1x1x512xf32>
    %71 = vector.broadcast %70 : vector<1x1x512xf32> to vector<1x8x512xf32>
    %72 = arith.mulf %69, %71 : vector<1x8x512xf32>
    %c0_50 = arith.constant 0 : index
    %c8_51 = arith.constant 8 : index
    %c32_52 = arith.constant 32 : index
    %73 = vector.load %arg5[%c0_50, %c8_51, %c32_52] : memref<1x18x576xf32, #tpu.memory_space<vmem>>, vector<1x8x512xf32>
    %74 = vector.shape_cast %12 : vector<1x512xf32> to vector<1x1x512xf32>
    %75 = vector.broadcast %74 : vector<1x1x512xf32> to vector<1x8x512xf32>
    %76 = arith.mulf %73, %75 : vector<1x8x512xf32>
    %77 = arith.addf %72, %76 : vector<1x8x512xf32>
    %c0_53 = arith.constant 0 : index
    %c8_54 = arith.constant 8 : index
    %c64_55 = arith.constant 64 : index
    %78 = vector.load %arg5[%c0_53, %c8_54, %c64_55] : memref<1x18x576xf32, #tpu.memory_space<vmem>>, vector<1x8x512xf32>
    %79 = vector.shape_cast %13 : vector<1x512xf32> to vector<1x1x512xf32>
    %80 = vector.broadcast %79 : vector<1x1x512xf32> to vector<1x8x512xf32>
    %81 = arith.mulf %78, %80 : vector<1x8x512xf32>
    %82 = arith.addf %77, %81 : vector<1x8x512xf32>
    %c0_56 = arith.constant 0 : index
    %c9 = arith.constant 9 : index
    %c0_57 = arith.constant 0 : index
    %83 = vector.load %arg5[%c0_56, %c9, %c0_57] : memref<1x18x576xf32, #tpu.memory_space<vmem>>, vector<1x8x512xf32>
    %84 = vector.shape_cast %14 : vector<1x512xf32> to vector<1x1x512xf32>
    %85 = vector.broadcast %84 : vector<1x1x512xf32> to vector<1x8x512xf32>
    %86 = arith.mulf %83, %85 : vector<1x8x512xf32>
    %87 = arith.addf %82, %86 : vector<1x8x512xf32>
    %c0_58 = arith.constant 0 : index
    %c9_59 = arith.constant 9 : index
    %c32_60 = arith.constant 32 : index
    %88 = vector.load %arg5[%c0_58, %c9_59, %c32_60] : memref<1x18x576xf32, #tpu.memory_space<vmem>>, vector<1x8x512xf32>
    %89 = vector.shape_cast %15 : vector<1x512xf32> to vector<1x1x512xf32>
    %90 = vector.broadcast %89 : vector<1x1x512xf32> to vector<1x8x512xf32>
    %91 = arith.mulf %88, %90 : vector<1x8x512xf32>
    %92 = arith.addf %87, %91 : vector<1x8x512xf32>
    %c0_61 = arith.constant 0 : index
    %c9_62 = arith.constant 9 : index
    %c64_63 = arith.constant 64 : index
    %93 = vector.load %arg5[%c0_61, %c9_62, %c64_63] : memref<1x18x576xf32, #tpu.memory_space<vmem>>, vector<1x8x512xf32>
    %94 = vector.shape_cast %16 : vector<1x512xf32> to vector<1x1x512xf32>
    %95 = vector.broadcast %94 : vector<1x1x512xf32> to vector<1x8x512xf32>
    %96 = arith.mulf %93, %95 : vector<1x8x512xf32>
    %97 = arith.addf %92, %96 : vector<1x8x512xf32>
    %c0_64 = arith.constant 0 : index
    %c10 = arith.constant 10 : index
    %c0_65 = arith.constant 0 : index
    %98 = vector.load %arg5[%c0_64, %c10, %c0_65] : memref<1x18x576xf32, #tpu.memory_space<vmem>>, vector<1x8x512xf32>
    %99 = vector.shape_cast %17 : vector<1x512xf32> to vector<1x1x512xf32>
    %100 = vector.broadcast %99 : vector<1x1x512xf32> to vector<1x8x512xf32>
    %101 = arith.mulf %98, %100 : vector<1x8x512xf32>
    %102 = arith.addf %97, %101 : vector<1x8x512xf32>
    %c0_66 = arith.constant 0 : index
    %c10_67 = arith.constant 10 : index
    %c32_68 = arith.constant 32 : index
    %103 = vector.load %arg5[%c0_66, %c10_67, %c32_68] : memref<1x18x576xf32, #tpu.memory_space<vmem>>, vector<1x8x512xf32>
    %104 = vector.shape_cast %18 : vector<1x512xf32> to vector<1x1x512xf32>
    %105 = vector.broadcast %104 : vector<1x1x512xf32> to vector<1x8x512xf32>
    %106 = arith.mulf %103, %105 : vector<1x8x512xf32>
    %107 = arith.addf %102, %106 : vector<1x8x512xf32>
    %c0_69 = arith.constant 0 : index
    %c10_70 = arith.constant 10 : index
    %c64_71 = arith.constant 64 : index
    %108 = vector.load %arg5[%c0_69, %c10_70, %c64_71] : memref<1x18x576xf32, #tpu.memory_space<vmem>>, vector<1x8x512xf32>
    %109 = vector.shape_cast %19 : vector<1x512xf32> to vector<1x1x512xf32>
    %110 = vector.broadcast %109 : vector<1x1x512xf32> to vector<1x8x512xf32>
    %111 = arith.mulf %108, %110 : vector<1x8x512xf32>
    %112 = arith.addf %107, %111 : vector<1x8x512xf32>
    %113 = vector.shape_cast %20 : vector<1x512xf32> to vector<1x1x512xf32>
    %114 = vector.broadcast %113 : vector<1x1x512xf32> to vector<1x8x512xf32>
    %115 = arith.addf %112, %114 : vector<1x8x512xf32>
    %c0_72 = arith.constant 0 : index
    %c8_73 = arith.constant 8 : index
    %c0_74 = arith.constant 0 : index
    %116 = vector.load %arg4[%c0_72, %c8_73, %c0_74] : memref<1x16x512xf32, #tpu.memory_space<vmem>>, vector<1x8x512xf32>
    tpu.vector_store %arg4[%c0_72, %c8_73, %c0_74], %115 {strides = array<i32>} : memref<1x16x512xf32, #tpu.memory_space<vmem>>, vector<1x8x512xf32>,
    return
  }
  func.func @transform_0(%arg0: i32) -> (i32, i32, i32) {
    %c0_i32 = arith.constant 0 : i32
    %c0_i32_0 = arith.constant 0 : i32
    %c0_i32_1 = arith.constant 0 : i32
    return %arg0, %c0_i32, %c0_i32_0 : i32, i32, i32
  }
  func.func @transform_1(%arg0: i32) -> (i32, i32) {
    %c0_i32 = arith.constant 0 : i32
    %c0_i32_0 = arith.constant 0 : i32
    %c0_i32_1 = arith.constant 0 : i32
    return %c0_i32, %c0_i32_0 : i32, i32
  }
  func.func @transform_2(%arg0: i32) -> (i32, i32) {
    %c0_i32 = arith.constant 0 : i32
    %c0_i32_0 = arith.constant 0 : i32
    %c0_i32_1 = arith.constant 0 : i32
    return %c0_i32, %c0_i32_0 : i32, i32
  }
  func.func @transform_3(%arg0: i32) -> (i32, i32, i32) {
    %c0_i32 = arith.constant 0 : i32
    %c0_i32_0 = arith.constant 0 : i32
    %c0_i32_1 = arith.constant 0 : i32
    return %arg0, %c0_i32, %c0_i32_0 : i32, i32, i32
  }
}

</mosaic_0001>

<llo_original>
// kernel: tpu_custom_call.1
$region0: #{tpu_custom_call.1}
  #allocation0 [shape = 'u32[]', space=smem, size = 0x4, offset = 0x4, fixed_abs, tag = 'smem constant byte address 0x4 - core index']
  #allocation1 [shape = 'u32[144,128]{1,0:T(1,128)}', space=vmem, size = 0x12000, scoped, tag = 'internal scratch']
  #allocation2 [shape = 'f32[1,18,576]{2,1,0:T(8,128)}', space=vmem, size = 0xf000, scoped, tag = 'scratch operand']
  %s0 = inlined_call_operand.hbm [shape: f32[2,16,512], index: 0, kind: input, shape index: {}]
  %s1 = inlined_call_operand.hbm [shape: f32[9,512], index: 1, kind: input, shape index: {}]
  %s2 = inlined_call_operand.hbm [shape: f32[1,512], index: 2, kind: input, shape index: {}]
  %s3 = inlined_call_operand.hbm [shape: f32[2,16,512], index: 3, kind: output, shape index: {}]
  %s4 = sld [smem:[#allocation0]]
  $region57: #{tpu_custom_call.1} parent=0
    _
  %s6 = ssub.s32 1, %s4
  %s7 = scalar_select 0, %s6, %s4
  $region1: #{tpu_custom_call.1} parent=0
    #allocation3 [shape = 'u8[65536]{0}', space=vmem, size = 0x10000, scoped, tag = 'input window, operand 0']
    #allocation4 [shape = 's32[2]{0}', space=sflag, size = 0x8, scoped, tag = 'scoped memory for tpu_custom_call.1']
    #allocation5 [shape = 's32[2]{0}', space=sflag, size = 0x8, scoped, tag = 'scoped memory for tpu_custom_call.1']
    #allocation6 [shape = 'u8[32768]{0}', space=vmem, size = 0x8000, scoped, tag = 'input window, operand 1, single buffered']
    #allocation7 [shape = 's32[1]{0}', space=sflag, size = 0x4, scoped, tag = 'scoped memory for tpu_custom_call.1']
    #allocation8 [shape = 'u8[2048]{0}', space=vmem, size = 0x800, scoped, tag = 'input window, operand 2, single buffered']
    #allocation9 [shape = 'u8[65536]{0}', space=vmem, size = 0x10000, scoped, tag = 'output window, operand 0']
    %8 = vsyncpa [#allocation4], 0
    %s9 = scalar_lea.sflag [#allocation4], 1
    %10 = vsyncpa %s9, 0
    %11 = vsyncpa [#allocation7], 0
    %12 = vsyncpa [#allocation5], 0
    %s13 = scalar_lea.sflag [#allocation5], 1
    %14 = vsyncpa %s13, 0
    loop: start=0, step=1, limit=4
    $region2: #{tpu_custom_call.1} parent=1 // loop_pre_header
      _
    $region3: #{tpu_custom_call.1} parent=1 // loop_header
      %s16 = sphi 0, %s20
      %p17 = scmp.ge.s32.totalorder %s16, 4
      %s26 = sphi 0, %s28
      %s29 = sphi 0, %s26
      %s30 = sphi 0, %s29
      %s46 = sphi 0, %s30
      %s50 = sphi 0, %s50
      %s52 = sphi 0, %s50
      %s53 = sphi 0, %s52
      %s67 = sphi 0, %s53
      %s71 = sphi 0, %s71
      %s73 = sphi 0, %s71
      %s74 = sphi 0, %s73
      %s88 = sphi 0, %s74
      %s94 = sphi 0, %s96
      %s97 = sphi 0, %s94
      %s98 = sphi 0, %s97
      %s114 = sphi 0, %s98
    $region4: #{tpu_custom_call.1} parent=1 // loop_header_branch
      %19 = sbr.rel (%p17) target = $region8
    $region5: #{tpu_custom_call.1} parent=1 // loop_body
      %s21 = ssub.s32 %s16, 1
      %s22 = ssub.s32 %s16, 2
      %s23 = sadd.s32 %s16, 1
      %s24 = ssub.s32 %s16, %s23
      %p25 = scmp.eq.s32.totalorder %s24, 0
      %s27 = sadd.s32 %s26, 1
      %s28 = scalar_select %p25, %s26, %s27
      %p31 = pneg %p25
      %p32 = scmp.eq.s32.totalorder %s16, 1
      %p33 = por %p31, %p32
      %p34 = scmp.ne.s32.totalorder %s26, %s29
      %p35 = scmp.eq.s32.totalorder %s16, 0
      %p36 = por %p34, %p35
      %p37 = scmp.ne.s32.totalorder %s26, %s29
      %p38 = scmp.eq.s32.totalorder %s21, 1
      %p39 = por %p37, %p38
      %p40 = scmp.ne.s32.totalorder %s29, %s30
      %p41 = scmp.eq.s32.totalorder %s21, 0
      %p42 = por %p40, %p41
      %p43 = scmp.ne.s32.totalorder %s29, %s30
      %p44 = scmp.eq.s32.totalorder %s22, 1
      %p45 = por %p43, %p44
      %p47 = scmp.ne.s32.totalorder %s30, %s46
      %p48 = scmp.eq.s32.totalorder %s22, 0
      %p49 = por %p47, %p48
      %s51 = sadd.s32 %s50, 1
      %p54 = scmp.eq.s32.totalorder %s16, 1
      %p55 = scmp.ne.s32.totalorder %s50, %s52
      %p56 = scmp.eq.s32.totalorder %s16, 0
      %p57 = por %p55, %p56
      %p58 = scmp.ne.s32.totalorder %s50, %s52
      %p59 = scmp.eq.s32.totalorder %s21, 1
      %p60 = por %p58, %p59
      %p61 = scmp.ne.s32.totalorder %s52, %s53
      %p62 = scmp.eq.s32.totalorder %s21, 0
      %p63 = por %p61, %p62
      %p64 = scmp.ne.s32.totalorder %s52, %s53
      %p65 = scmp.eq.s32.totalorder %s22, 1
      %p66 = por %p64, %p65
      %p68 = scmp.ne.s32.totalorder %s53, %s67
      %p69 = scmp.eq.s32.totalorder %s22, 0
      %p70 = por %p68, %p69
      %s72 = sadd.s32 %s71, 1
      %p75 = scmp.eq.s32.totalorder %s16, 1
      %p76 = scmp.ne.s32.totalorder %s71, %s73
      %p77 = scmp.eq.s32.totalorder %s16, 0
      %p78 = por %p76, %p77
      %p79 = scmp.ne.s32.totalorder %s71, %s73
      %p80 = scmp.eq.s32.totalorder %s21, 1
      %p81 = por %p79, %p80
      %p82 = scmp.ne.s32.totalorder %s73, %s74
      %p83 = scmp.eq.s32.totalorder %s21, 0
      %p84 = por %p82, %p83
      %p85 = scmp.ne.s32.totalorder %s73, %s74
      %p86 = scmp.eq.s32.totalorder %s22, 1
      %p87 = por %p85, %p86
      %p89 = scmp.ne.s32.totalorder %s74, %s88
      %p90 = scmp.eq.s32.totalorder %s22, 0
      %p91 = por %p89, %p90
      %s92 = ssub.s32 %s16, %s23
      %p93 = scmp.eq.s32.totalorder %s92, 0
      %s95 = sadd.s32 %s94, 1
      %s96 = scalar_select %p93, %s94, %s95
      %p99 = pneg %p93
      %p100 = scmp.eq.s32.totalorder %s16, 1
      %p101 = por %p99, %p100
      %p102 = scmp.ne.s32.totalorder %s94, %s97
      %p103 = scmp.eq.s32.totalorder %s16, 0
      %p104 = por %p102, %p103
      %p105 = scmp.ne.s32.totalorder %s94, %s97
      %p106 = scmp.eq.s32.totalorder %s21, 1
      %p107 = por %p105, %p106
      %p108 = scmp.ne.s32.totalorder %s97, %s98
      %p109 = scmp.eq.s32.totalorder %s21, 0
      %p110 = por %p108, %p109
      %p111 = scmp.ne.s32.totalorder %s97, %s98
      %p112 = scmp.eq.s32.totalorder %s22, 1
      %p113 = por %p111, %p112
      %p115 = scmp.ne.s32.totalorder %s98, %s114
      %p116 = scmp.eq.s32.totalorder %s22, 0
      %p117 = por %p115, %p116
      %p118 = scmp.le.s32.totalorder 1, %s16
      %p119 = scmp.lt.s32.totalorder %s16, 3
      %p120 = pnand %p118, %p119
      %p121 = pneg %p120
      // Predicated region
      $region9: #{tpu_custom_call.1} parent=5 // pred_check
        _
      $region10: #{tpu_custom_call.1} parent=5 // pred_check_branch
        %123 = sbr.rel (%p120) target = $region12
      $region11: #{tpu_custom_call.1} parent=5 // pred_region
        %s124 = ssub.s32 %s16, 1
        // Predicated region
        $region13: #{tpu_custom_call.1} parent=11 // pred_check
          %p125 = pneg %p63
        $region14: #{tpu_custom_call.1} parent=11 // pred_check_branch
          %127 = sbr.rel (%p125) target = $region16
        $region15: #{tpu_custom_call.1} parent=11 // pred_region
          %s129 = ssub.s32 1024, 1024
          %130 = vsyncadd [#allocation7], %s129
          %s131 = sshll.u32 [#allocation6], 4
          %s132 = int_to_ptr.vmem [resolvable:$true] %s131
          %137 = dma.hbm_to_vmem [thread:$0]  %s1, 1024, %s132, [#allocation7], 512, 512, 32
        $region16: #{tpu_custom_call.1} parent=11 // pred_fallthru
          _
        // Predicated region
        $region17: #{tpu_custom_call.1} parent=11 // pred_check
          %p138 = pneg %p84
        $region18: #{tpu_custom_call.1} parent=11 // pred_check_branch
          %140 = sbr.rel (%p138) target = $region20
        $region19: #{tpu_custom_call.1} parent=11 // pred_region
          %s142 = ssub.s32 64, 64
          %143 = vsyncadd [#allocation7], %s142
          %s145 = sshll.u32 [#allocation8], 4
          %s146 = int_to_ptr.vmem [resolvable:$true] %s145
          %148 = dma.hbm_to_vmem [thread:$0]  %s2, 64, %s146, [#allocation7]
        $region20: #{tpu_custom_call.1} parent=11 // pred_fallthru
          _
      $region12: #{tpu_custom_call.1} parent=5 // pred_fallthru
        _
      %p149 = scmp.lt.s32.totalorder %s16, 2
      // Predicated region
      $region21: #{tpu_custom_call.1} parent=5 // pred_check
        %p150 = pneg %p149
      $region22: #{tpu_custom_call.1} parent=5 // pred_check_branch
        %152 = sbr.rel (%p150) target = $region24
      $region23: #{tpu_custom_call.1} parent=5 // pred_region
        // Predicated region
        $region25: #{tpu_custom_call.1} parent=23 // pred_check
          %p153 = pneg %p36
        $region26: #{tpu_custom_call.1} parent=23 // pred_check_branch
          %155 = sbr.rel (%p153) target = $region28
        $region27: #{tpu_custom_call.1} parent=23 // pred_region
          %s156 = sand.u32 %s26, 1
          %s157 = scalar_lea.sflag [#allocation4], %s156
          %s158 = sand.u32 %s26, 1
          %s159 = smul.addr %s158, 64
          %s160 = scalar_lea.vmem [#allocation3], %s159
          %s162 = ssub.s32 1024, 1024
          %163 = vsyncadd %s157, %s162
          %s164 = smul.addr %s16, 8
          %s165 = smul.addr %s164, 128
          %s166 = scalar_lea.hbm %s0, %s165
          %s167 = sshll.u32 %s160, 4
          %s168 = int_to_ptr.vmem [resolvable:$true] %s167
          %173 = dma.hbm_to_vmem [thread:$0]  %s166, 1024, %s168, %s157, 512, 512, 32
        $region28: #{tpu_custom_call.1} parent=23 // pred_fallthru
          _
      $region24: #{tpu_custom_call.1} parent=5 // pred_fallthru
        _
      %p174 = scmp.le.s32.totalorder 1, %s16
      %p175 = scmp.lt.s32.totalorder %s16, 3
      %p176 = pnand %p174, %p175
      %p177 = pneg %p176
      // Predicated region
      $region29: #{tpu_custom_call.1} parent=5 // pred_check
        _
      $region30: #{tpu_custom_call.1} parent=5 // pred_check_branch
        %179 = sbr.rel (%p176) target = $region32
      $region31: #{tpu_custom_call.1} parent=5 // pred_region
        %s180 = ssub.s32 %s16, 1
        %s181 = sand.u32 %s29, 1
        %s182 = scalar_lea.sflag [#allocation4], %s181
        %s183 = sand.u32 %s29, 1
        %s184 = smul.addr %s183, 64
        %s185 = scalar_lea.vmem [#allocation3], %s184
        // Predicated region
        $region33: #{tpu_custom_call.1} parent=31 // pred_check
          %p186 = pneg %p42
        $region34: #{tpu_custom_call.1} parent=31 // pred_check_branch
          %188 = sbr.rel (%p186) target = $region36
        $region35: #{tpu_custom_call.1} parent=31 // pred_region
          %189 = dma.done %s182, 1024
        $region36: #{tpu_custom_call.1} parent=31 // pred_fallthru
          _
        // Predicated region
        $region37: #{tpu_custom_call.1} parent=31 // pred_check
          %p190 = pneg %p63
        $region38: #{tpu_custom_call.1} parent=31 // pred_check_branch
          %192 = sbr.rel (%p190) target = $region40
        $region39: #{tpu_custom_call.1} parent=31 // pred_region
          %193 = dma.done [#allocation7], 1024
        $region40: #{tpu_custom_call.1} parent=31 // pred_fallthru
          _
        // Predicated region
        $region41: #{tpu_custom_call.1} parent=31 // pred_check
          %p194 = pneg %p84
        $region42: #{tpu_custom_call.1} parent=31 // pred_check_branch
          %196 = sbr.rel (%p194) target = $region44
        $region43: #{tpu_custom_call.1} parent=31 // pred_region
          %197 = dma.done [#allocation7], 64
        $region44: #{tpu_custom_call.1} parent=31 // pred_fallthru
          _
        %s198 = sand.u32 %s29, 1
        %s199 = scalar_lea.sflag [#allocation4], %s198
        %s200 = sand.u32 %s29, 1
        %s201 = smul.addr %s200, 64
        %s202 = scalar_lea.vmem [#allocation3], %s201
        %p203 = pneg %p42
        %p204 = pneg %p39
        %p205 = pneg %p63
        %p206 = pneg %p60
        %p207 = pneg %p84
        %p208 = pneg %p81
        %p209 = pneg %p110
        %p210 = pneg %p107
        %s211 = sand.u32 %s97, 1
        %s212 = scalar_lea.sflag [#allocation5], %s211
        %s213 = sand.u32 %s97, 1
        %s214 = smul.addr %s213, 64
        %s215 = scalar_lea.vmem [#allocation9], %s214
        %v216 = vlaneseq
        %vm217 = vcmp.ge.s32.totalorder %v216, 0
        %vm218 = vcmp.lt.s32.totalorder %v216, 576
        %vm219 = vmand %vm217, %vm218
        %220 = vst.msk [vmem:[#allocation2] ss:$8 sm:$0xf] %vm219, 0.0
        %221 = vst.msk [vmem:[#allocation2] ss:$8 sm:$0x10] %vm219, 0.0
        %s222 = scalar_lea.vmem [#allocation2], 81
        %223 = vst.msk [vmem:[%s222] ss:$8 sm:$0xf] %vm219, 0.0
        %224 = vst.msk [vmem:[%s222] ss:$8 sm:$0x10] %vm219, 0.0
        %vm225 = vcmask 261120
        %226 = vst.msk [vmem:[#allocation2] sm:$0xff] %vm225, 0.0
        %227 = vst.msk [vmem:[#allocation2 + $0x28] sm:$0xff] %vm225, 0.0
        %vm228 = vcmask 254976
        %229 = vst.msk [vmem:[#allocation2 + $0x50] sm:$0x3] %vm228, 0.0
        %vm230 = vcmask 523520
        %231 = vst.msk [vmem:[#allocation2 + $0x20] sm:$0xff] %vm230, 0.0
        %232 = vst.msk [vmem:[#allocation2 + $0x48] sm:$0xff] %vm230, 0.0
        %vm233 = vcmask 517376
        %234 = vst.msk [vmem:[#allocation2 + $0x70] sm:$0x3] %vm233, 0.0
        %v235 = vld [vmem:[%s185] sm:$0xff]
        %v236 = vld [vmem:[%s185 + $0x8] sm:$0xff]
        %v237 = vld [vmem:[%s185 + $0x10] sm:$0xff]
        %v238 = vld [vmem:[%s185 + $0x18] sm:$0xff]
        %v239 = vld [vmem:[%s185 + $0x20] sm:$0xff]
        %v240 = vld [vmem:[%s185 + $0x28] sm:$0xff]
        %v241 = vld [vmem:[%s185 + $0x30] sm:$0xff]
        %v242 = vld [vmem:[%s185 + $0x38] sm:$0xff]
        %vm251 = vcmask 1040384
        %v252 = vrot.slane %v235, 7
        %v253 = vrot.slane %v236, 7
        %v254 = vrot.slane %v237, 7
        %v255 = vrot.slane %v238, 7
        %v256 = vrot.slane %v239, 7
        %v257 = vsel %vm251, %v252, %v256
        %v258 = vrot.slane %v240, 7
        %v259 = vsel %vm251, %v253, %v258
        %v260 = vrot.slane %v241, 7
        %v261 = vsel %vm251, %v254, %v260
        %v262 = vrot.slane %v242, 7
        %v263 = vsel %vm251, %v255, %v262
        %264 = vrot.lane.b32.xlu0 %v252, 32
        %v265 = vpop.permute.xlu0 %264
        %266 = vrot.lane.b32.xlu0 %v253, 32
        %v267 = vpop.permute.xlu0 %266
        %268 = vrot.lane.b32.xlu0 %v254, 32
        %v269 = vpop.permute.xlu0 %268
        %270 = vrot.lane.b32.xlu0 %v255, 32
        %v271 = vpop.permute.xlu0 %270
        %272 = vrot.lane.b32.xlu0 %v257, 32
        %v273 = vpop.permute.xlu0 %272
        %274 = vrot.lane.b32.xlu0 %v259, 32
        %v275 = vpop.permute.xlu0 %274
        %276 = vrot.lane.b32.xlu0 %v261, 32
        %v277 = vpop.permute.xlu0 %276
        %278 = vrot.lane.b32.xlu0 %v263, 32
        %v279 = vpop.permute.xlu0 %278
        %280 = vrot.lane.b32.xlu0 %v256, 32
        %v281 = vpop.permute.xlu0 %280
        %282 = vrot.lane.b32.xlu0 %v258, 32
        %v283 = vpop.permute.xlu0 %282
        %284 = vrot.lane.b32.xlu0 %v260, 32
        %v285 = vpop.permute.xlu0 %284
        %286 = vrot.lane.b32.xlu0 %v262, 32
        %v287 = vpop.permute.xlu0 %286
        %v288 = vsel %vm225, %v265, %v267
        %v289 = vsel %vm225, %v267, %v269
        %v290 = vsel %vm225, %v269, %v271
        %v291 = vsel %vm225, %v273, %v275
        %v292 = vsel %vm225, %v275, %v277
        %v293 = vsel %vm225, %v277, %v279
        %v294 = vsel %vm225, %v281, %v283
        %v295 = vsel %vm225, %v283, %v285
        %v296 = vsel %vm225, %v285, %v287
        %vm312 = vcmask 1047809
        %313 = vst.msk [vmem:[#allocation2] sm:$0xfe] %vm312, %v265
        %314 = vst [vmem:[#allocation2 + $0x8] sm:$0xfe] %v288
        %315 = vst [vmem:[#allocation2 + $0x10] sm:$0xfe] %v289
        %316 = vst [vmem:[#allocation2 + $0x18] sm:$0xfe] %v290
        %vm317 = vcmask 261121
        %318 = vst.msk [vmem:[#allocation2 + $0x20] sm:$0xfe] %vm317, %v271
        %vm319 = vcmask 1047808
        %320 = vst.msk [vmem:[#allocation2 + $0x28] sm:$0xff] %vm319, %v273
        %321 = vst [vmem:[#allocation2 + $0x30] sm:$0xff] %v291
        %322 = vst [vmem:[#allocation2 + $0x38] sm:$0xff] %v292
        %323 = vst [vmem:[#allocation2 + $0x40] sm:$0xff] %v293
        %324 = vst.msk [vmem:[#allocation2 + $0x48] sm:$0xff] %vm225, %v279
        %vm325 = vcmask 1040640
        %326 = vst.msk [vmem:[#allocation2 + $0x50] sm:$0x1] %vm325, %v281
        %327 = vst [vmem:[#allocation2 + $0x58] sm:$0x1] %v294
        %328 = vst [vmem:[#allocation2 + $0x60] sm:$0x1] %v295
        %329 = vst [vmem:[#allocation2 + $0x68] sm:$0x1] %v296
        %vm330 = vcmask 253952
        %331 = vst.msk [vmem:[#allocation2 + $0x70] sm:$0x1] %vm330, %v287
        %v332 = vld [vmem:[#allocation6] sm:$0xff]
        %v333 = vld [vmem:[#allocation6 + $0x8] sm:$0xff]
        %v334 = vld [vmem:[#allocation6 + $0x10] sm:$0xff]
        %v335 = vld [vmem:[#allocation6 + $0x18] sm:$0xff]
        %v336 = vld [vmem:[#allocation6 + $0x20] sm:$0x1]
        %v337 = vld [vmem:[#allocation6 + $0x28] sm:$0x1]
        %v338 = vld [vmem:[#allocation6 + $0x30] sm:$0x1]
        %v339 = vld [vmem:[#allocation6 + $0x38] sm:$0x1]
        %v340 = vld [vmem:[#allocation8] sm:$0xf]
        %v341 = vld [vmem:[#allocation2] sm:$0xff]
        %v342 = vld [vmem:[#allocation2 + $0x8] sm:$0xff]
        %v343 = vld [vmem:[#allocation2 + $0x10] sm:$0xff]
        %v344 = vld [vmem:[#allocation2 + $0x18] sm:$0xff]
        %v345 = vlaneseq
        %v346 = vshrl.u32 %v345, 7
        %v347 = vsub.s32 0, %v346
        %v348 = vrot.slane %v332, %v347
        %v349 = vlaneseq
        %v350 = vshrl.u32 %v349, 7
        %v351 = vsub.s32 0, %v350
        %v352 = vrot.slane %v333, %v351
        %v353 = vlaneseq
        %v354 = vshrl.u32 %v353, 7
        %v355 = vsub.s32 0, %v354
        %v356 = vrot.slane %v334, %v355
        %v357 = vlaneseq
        %v358 = vshrl.u32 %v357, 7
        %v359 = vsub.s32 0, %v358
        %v360 = vrot.slane %v335, %v359
        %v361 = vmul.f32 %v341, %v348
        %v362 = vmul.f32 %v342, %v352
        %v363 = vmul.f32 %v343, %v356
        %v364 = vmul.f32 %v344, %v360
        %v365 = vld [vmem:[#allocation2 + $0x20] sm:$0xff]
        %v366 = vlaneseq
        %v367 = vshrl.u32 %v366, 7
        %v368 = vsub.s32 1, %v367
        %v369 = vrot.slane %v332, %v368
        %v370 = vlaneseq
        %v371 = vshrl.u32 %v370, 7
        %v372 = vsub.s32 1, %v371
        %v373 = vrot.slane %v333, %v372
        %v374 = vlaneseq
        %v375 = vshrl.u32 %v374, 7
        %v376 = vsub.s32 1, %v375
        %v377 = vrot.slane %v334, %v376
        %v378 = vlaneseq
        %v379 = vshrl.u32 %v378, 7
        %v380 = vsub.s32 1, %v379
        %v381 = vrot.slane %v335, %v380
        %386 = vrot.lane.b32.xlu0 %v369, 32
        %v387 = vpop.permute.xlu0 %386
        %388 = vrot.lane.b32.xlu0 %v373, 32
        %v389 = vpop.permute.xlu0 %388
        %390 = vrot.lane.b32.xlu0 %v377, 32
        %v391 = vpop.permute.xlu0 %390
        %392 = vrot.lane.b32.xlu0 %v381, 32
        %v393 = vpop.permute.xlu0 %392
        %v394 = vsel %vm225, %v387, %v389
        %v395 = vsel %vm225, %v389, %v391
        %v396 = vsel %vm225, %v391, %v393
        %v402 = vmul.f32 %v341, %v387
        %v403 = vmul.f32 %v342, %v394
        %v404 = vmul.f32 %v343, %v395
        %v405 = vmul.f32 %v344, %v396
        %v406 = vmul.f32 %v365, %v393
        %412 = vrot.lane.b32.xlu0 %v402, 96
        %v413 = vpop.permute.xlu0 %412
        %414 = vrot.lane.b32.xlu0 %v403, 96
        %v415 = vpop.permute.xlu0 %414
        %416 = vrot.lane.b32.xlu0 %v404, 96
        %v417 = vpop.permute.xlu0 %416
        %418 = vrot.lane.b32.xlu0 %v405, 96
        %v419 = vpop.permute.xlu0 %418
        %420 = vrot.lane.b32.xlu0 %v406, 96
        %v421 = vpop.permute.xlu0 %420
        %vm422 = vcmask 785408
        %v423 = vsel %vm422, %v413, %v415
        %v424 = vsel %vm422, %v415, %v417
        %v425 = vsel %vm422, %v417, %v419
        %v426 = vsel %vm422, %v419, %v421
        %v431 = vadd.f32 %v361, %v423
        %v432 = vadd.f32 %v362, %v424
        %v433 = vadd.f32 %v363, %v425
        %v434 = vadd.f32 %v364, %v426
        %v435 = vlaneseq
        %v436 = vshrl.u32 %v435, 7
        %v437 = vsub.s32 2, %v436
        %v438 = vrot.slane %v332, %v437
        %v439 = vlaneseq
        %v440 = vshrl.u32 %v439, 7
        %v441 = vsub.s32 2, %v440
        %v442 = vrot.slane %v333, %v441
        %v443 = vlaneseq
        %v444 = vshrl.u32 %v443, 7
        %v445 = vsub.s32 2, %v444
        %v446 = vrot.slane %v334, %v445
        %v447 = vlaneseq
        %v448 = vshrl.u32 %v447, 7
        %v449 = vsub.s32 2, %v448
        %v450 = vrot.slane %v335, %v449
        %455 = vrot.lane.b32.xlu0 %v438, 64
        %v456 = vpop.permute.xlu0 %455
        %457 = vrot.lane.b32.xlu0 %v442, 64
        %v458 = vpop.permute.xlu0 %457
        %459 = vrot.lane.b32.xlu0 %v446, 64
        %v460 = vpop.permute.xlu0 %459
        %461 = vrot.lane.b32.xlu0 %v450, 64
        %v462 = vpop.permute.xlu0 %461
        %vm463 = vcmask 523264
        %v464 = vsel %vm463, %v456, %v458
        %v465 = vsel %vm463, %v458, %v460
        %v466 = vsel %vm463, %v460, %v462
        %v472 = vmul.f32 %v341, %v456
        %v473 = vmul.f32 %v342, %v464
        %v474 = vmul.f32 %v343, %v465
        %v475 = vmul.f32 %v344, %v466
        %v476 = vmul.f32 %v365, %v462
        %482 = vrot.lane.b32.xlu0 %v472, 64
        %v483 = vpop.permute.xlu0 %482
        %484 = vrot.lane.b32.xlu0 %v473, 64
        %v485 = vpop.permute.xlu0 %484
        %486 = vrot.lane.b32.xlu0 %v474, 64
        %v487 = vpop.permute.xlu0 %486
        %488 = vrot.lane.b32.xlu0 %v475, 64
        %v489 = vpop.permute.xlu0 %488
        %490 = vrot.lane.b32.xlu0 %v476, 64
        %v491 = vpop.permute.xlu0 %490
        %v492 = vsel %vm463, %v483, %v485
        %v493 = vsel %vm463, %v485, %v487
        %v494 = vsel %vm463, %v487, %v489
        %v495 = vsel %vm463, %v489, %v491
        %v500 = vadd.f32 %v431, %v492
        %v501 = vadd.f32 %v432, %v493
        %v502 = vadd.f32 %v433, %v494
        %v503 = vadd.f32 %v434, %v495
        %v504 = vld [vmem:[#allocation2] sm:$0xfe]
        %v505 = vld [vmem:[#allocation2 + $0x8] sm:$0xfe]
        %v506 = vld [vmem:[#allocation2 + $0x10] sm:$0xfe]
        %v507 = vld [vmem:[#allocation2 + $0x18] sm:$0xfe]
        %v508 = vld [vmem:[#allocation2 + $0x28] sm:$0x1]
        %v509 = vld [vmem:[#allocation2 + $0x30] sm:$0x1]
        %v510 = vld [vmem:[#allocation2 + $0x38] sm:$0x1]
        %v511 = vld [vmem:[#allocation2 + $0x40] sm:$0x1]
        %v512 = vlaneseq
        %v513 = vshrl.u32 %v512, 7
        %v514 = vsub.s32 3, %v513
        %v515 = vrot.slane %v332, %v514
        %v516 = vlaneseq
        %v517 = vshrl.u32 %v516, 7
        %v518 = vsub.s32 3, %v517
        %v519 = vrot.slane %v333, %v518
        %v520 = vlaneseq
        %v521 = vshrl.u32 %v520, 7
        %v522 = vsub.s32 3, %v521
        %v523 = vrot.slane %v334, %v522
        %v524 = vlaneseq
        %v525 = vshrl.u32 %v524, 7
        %v526 = vsub.s32 3, %v525
        %v527 = vrot.slane %v335, %v526
        %v528 = vmul.f32 %v504, %v515
        %v529 = vmul.f32 %v505, %v519
        %v530 = vmul.f32 %v506, %v523
        %v531 = vmul.f32 %v507, %v527
        %v532 = vmul.f32 %v508, %v515
        %v533 = vmul.f32 %v509, %v519
        %v534 = vmul.f32 %v510, %v523
        %v535 = vmul.f32 %v511, %v527
        %vm544 = vcmask 1046528
        %v545 = vrot.slane %v528, 1
        %v546 = vrot.slane %v532, 1
        %v547 = vsel %vm544, %v545, %v546
        %v548 = vrot.slane %v529, 1
        %v549 = vrot.slane %v533, 1
        %v550 = vsel %vm544, %v548, %v549
        %v551 = vrot.slane %v530, 1
        %v552 = vrot.slane %v534, 1
        %v553 = vsel %vm544, %v551, %v552
        %v554 = vrot.slane %v531, 1
        %v555 = vrot.slane %v535, 1
        %v556 = vsel %vm544, %v554, %v555
        %v561 = vadd.f32 %v500, %v547
        %v562 = vadd.f32 %v501, %v550
        %v563 = vadd.f32 %v502, %v553
        %v564 = vadd.f32 %v503, %v556
        %v565 = vld [vmem:[#allocation2 + $0x20] sm:$0xfe]
        %v566 = vld [vmem:[#allocation2 + $0x48] sm:$0x1]
        %v567 = vlaneseq
        %v568 = vshrl.u32 %v567, 7
        %v569 = vsub.s32 4, %v568
        %v570 = vrot.slane %v332, %v569
        %v571 = vlaneseq
        %v572 = vshrl.u32 %v571, 7
        %v573 = vsub.s32 4, %v572
        %v574 = vrot.slane %v333, %v573
        %v575 = vlaneseq
        %v576 = vshrl.u32 %v575, 7
        %v577 = vsub.s32 4, %v576
        %v578 = vrot.slane %v334, %v577
        %v579 = vlaneseq
        %v580 = vshrl.u32 %v579, 7
        %v581 = vsub.s32 4, %v580
        %v582 = vrot.slane %v335, %v581
        %587 = vrot.lane.b32.xlu0 %v570, 32
        %v588 = vpop.permute.xlu0 %587
        %589 = vrot.lane.b32.xlu0 %v574, 32
        %v590 = vpop.permute.xlu0 %589
        %591 = vrot.lane.b32.xlu0 %v578, 32
        %v592 = vpop.permute.xlu0 %591
        %593 = vrot.lane.b32.xlu0 %v582, 32
        %v594 = vpop.permute.xlu0 %593
        %v595 = vsel %vm225, %v588, %v590
        %v596 = vsel %vm225, %v590, %v592
        %v597 = vsel %vm225, %v592, %v594
        %v603 = vmul.f32 %v504, %v588
        %v604 = vmul.f32 %v505, %v595
        %v605 = vmul.f32 %v506, %v596
        %v606 = vmul.f32 %v507, %v597
        %v607 = vmul.f32 %v565, %v594
        %v608 = vmul.f32 %v508, %v588
        %v609 = vmul.f32 %v509, %v595
        %v610 = vmul.f32 %v510, %v596
        %v611 = vmul.f32 %v511, %v597
        %v612 = vmul.f32 %v566, %v594
        %v623 = vrot.slane %v603, 1
        %v624 = vrot.slane %v608, 1
        %v625 = vsel %vm544, %v623, %v624
        %v626 = vrot.slane %v604, 1
        %v627 = vrot.slane %v609, 1
        %v628 = vsel %vm544, %v626, %v627
        %v629 = vrot.slane %v605, 1
        %v630 = vrot.slane %v610, 1
        %v631 = vsel %vm544, %v629, %v630
        %v632 = vrot.slane %v606, 1
        %v633 = vrot.slane %v611, 1
        %v634 = vsel %vm544, %v632, %v633
        %v635 = vrot.slane %v607, 1
        %v636 = vrot.slane %v612, 1
        %v637 = vsel %vm544, %v635, %v636
        %638 = vrot.lane.b32.xlu0 %v625, 96
        %v639 = vpop.permute.xlu0 %638
        %640 = vrot.lane.b32.xlu0 %v628, 96
        %v641 = vpop.permute.xlu0 %640
        %642 = vrot.lane.b32.xlu0 %v631, 96
        %v643 = vpop.permute.xlu0 %642
        %644 = vrot.lane.b32.xlu0 %v634, 96
        %v645 = vpop.permute.xlu0 %644
        %646 = vrot.lane.b32.xlu0 %v637, 96
        %v647 = vpop.permute.xlu0 %646
        %v648 = vsel %vm422, %v639, %v641
        %v649 = vsel %vm422, %v641, %v643
        %v650 = vsel %vm422, %v643, %v645
        %v651 = vsel %vm422, %v645, %v647
        %v656 = vadd.f32 %v561, %v648
        %v657 = vadd.f32 %v562, %v649
        %v658 = vadd.f32 %v563, %v650
        %v659 = vadd.f32 %v564, %v651
        %v660 = vlaneseq
        %v661 = vshrl.u32 %v660, 7
        %v662 = vsub.s32 5, %v661
        %v663 = vrot.slane %v332, %v662
        %v664 = vlaneseq
        %v665 = vshrl.u32 %v664, 7
        %v666 = vsub.s32 5, %v665
        %v667 = vrot.slane %v333, %v666
        %v668 = vlaneseq
        %v669 = vshrl.u32 %v668, 7
        %v670 = vsub.s32 5, %v669
        %v671 = vrot.slane %v334, %v670
        %v672 = vlaneseq
        %v673 = vshrl.u32 %v672, 7
        %v674 = vsub.s32 5, %v673
        %v675 = vrot.slane %v335, %v674
        %680 = vrot.lane.b32.xlu0 %v663, 64
        %v681 = vpop.permute.xlu0 %680
        %682 = vrot.lane.b32.xlu0 %v667, 64
        %v683 = vpop.permute.xlu0 %682
        %684 = vrot.lane.b32.xlu0 %v671, 64
        %v685 = vpop.permute.xlu0 %684
        %686 = vrot.lane.b32.xlu0 %v675, 64
        %v687 = vpop.permute.xlu0 %686
        %v688 = vsel %vm463, %v681, %v683
        %v689 = vsel %vm463, %v683, %v685
        %v690 = vsel %vm463, %v685, %v687
        %v696 = vmul.f32 %v504, %v681
        %v697 = vmul.f32 %v505, %v688
        %v698 = vmul.f32 %v506, %v689
        %v699 = vmul.f32 %v507, %v690
        %v700 = vmul.f32 %v565, %v687
        %v701 = vmul.f32 %v508, %v681
        %v702 = vmul.f32 %v509, %v688
        %v703 = vmul.f32 %v510, %v689
        %v704 = vmul.f32 %v511, %v690
        %v705 = vmul.f32 %v566, %v687
        %v716 = vrot.slane %v696, 1
        %v717 = vrot.slane %v701, 1
        %v718 = vsel %vm544, %v716, %v717
        %v719 = vrot.slane %v697, 1
        %v720 = vrot.slane %v702, 1
        %v721 = vsel %vm544, %v719, %v720
        %v722 = vrot.slane %v698, 1
        %v723 = vrot.slane %v703, 1
        %v724 = vsel %vm544, %v722, %v723
        %v725 = vrot.slane %v699, 1
        %v726 = vrot.slane %v704, 1
        %v727 = vsel %vm544, %v725, %v726
        %v728 = vrot.slane %v700, 1
        %v729 = vrot.slane %v705, 1
        %v730 = vsel %vm544, %v728, %v729
        %731 = vrot.lane.b32.xlu0 %v718, 64
        %v732 = vpop.permute.xlu0 %731
        %733 = vrot.lane.b32.xlu0 %v721, 64
        %v734 = vpop.permute.xlu0 %733
        %735 = vrot.lane.b32.xlu0 %v724, 64
        %v736 = vpop.permute.xlu0 %735
        %737 = vrot.lane.b32.xlu0 %v727, 64
        %v738 = vpop.permute.xlu0 %737
        %739 = vrot.lane.b32.xlu0 %v730, 64
        %v740 = vpop.permute.xlu0 %739
        %v741 = vsel %vm463, %v732, %v734
        %v742 = vsel %vm463, %v734, %v736
        %v743 = vsel %vm463, %v736, %v738
        %v744 = vsel %vm463, %v738, %v740
        %v749 = vadd.f32 %v656, %v741
        %v750 = vadd.f32 %v657, %v742
        %v751 = vadd.f32 %v658, %v743
        %v752 = vadd.f32 %v659, %v744
        %v753 = vld [vmem:[#allocation2] sm:$0xfc]
        %v754 = vld [vmem:[#allocation2 + $0x8] sm:$0xfc]
        %v755 = vld [vmem:[#allocation2 + $0x10] sm:$0xfc]
        %v756 = vld [vmem:[#allocation2 + $0x18] sm:$0xfc]
        %v757 = vld [vmem:[#allocation2 + $0x28] sm:$0x3]
        %v758 = vld [vmem:[#allocation2 + $0x30] sm:$0x3]
        %v759 = vld [vmem:[#allocation2 + $0x38] sm:$0x3]
        %v760 = vld [vmem:[#allocation2 + $0x40] sm:$0x3]
        %v761 = vlaneseq
        %v762 = vshrl.u32 %v761, 7
        %v763 = vsub.s32 6, %v762
        %v764 = vrot.slane %v332, %v763
        %v765 = vlaneseq
        %v766 = vshrl.u32 %v765, 7
        %v767 = vsub.s32 6, %v766
        %v768 = vrot.slane %v333, %v767
        %v769 = vlaneseq
        %v770 = vshrl.u32 %v769, 7
        %v771 = vsub.s32 6, %v770
        %v772 = vrot.slane %v334, %v771
        %v773 = vlaneseq
        %v774 = vshrl.u32 %v773, 7
        %v775 = vsub.s32 6, %v774
        %v776 = vrot.slane %v335, %v775
        %v777 = vmul.f32 %v753, %v764
        %v778 = vmul.f32 %v754, %v768
        %v779 = vmul.f32 %v755, %v772
        %v780 = vmul.f32 %v756, %v776
        %v781 = vmul.f32 %v757, %v764
        %v782 = vmul.f32 %v758, %v768
        %v783 = vmul.f32 %v759, %v772
        %v784 = vmul.f32 %v760, %v776
        %vm793 = vcmask 1045504
        %v794 = vrot.slane %v777, 2
        %v795 = vrot.slane %v781, 2
        %v796 = vsel %vm793, %v794, %v795
        %v797 = vrot.slane %v778, 2
        %v798 = vrot.slane %v782, 2
        %v799 = vsel %vm793, %v797, %v798
        %v800 = vrot.slane %v779, 2
        %v801 = vrot.slane %v783, 2
        %v802 = vsel %vm793, %v800, %v801
        %v803 = vrot.slane %v780, 2
        %v804 = vrot.slane %v784, 2
        %v805 = vsel %vm793, %v803, %v804
        %v810 = vadd.f32 %v749, %v796
        %v811 = vadd.f32 %v750, %v799
        %v812 = vadd.f32 %v751, %v802
        %v813 = vadd.f32 %v752, %v805
        %v814 = vld [vmem:[#allocation2 + $0x20] sm:$0xfc]
        %v815 = vld [vmem:[#allocation2 + $0x48] sm:$0x3]
        %v816 = vlaneseq
        %v817 = vshrl.u32 %v816, 7
        %v818 = vsub.s32 7, %v817
        %v819 = vrot.slane %v332, %v818
        %v820 = vlaneseq
        %v821 = vshrl.u32 %v820, 7
        %v822 = vsub.s32 7, %v821
        %v823 = vrot.slane %v333, %v822
        %v824 = vlaneseq
        %v825 = vshrl.u32 %v824, 7
        %v826 = vsub.s32 7, %v825
        %v827 = vrot.slane %v334, %v826
        %v828 = vlaneseq
        %v829 = vshrl.u32 %v828, 7
        %v830 = vsub.s32 7, %v829
        %v831 = vrot.slane %v335, %v830
        %836 = vrot.lane.b32.xlu0 %v819, 32
        %v837 = vpop.permute.xlu0 %836
        %838 = vrot.lane.b32.xlu0 %v823, 32
        %v839 = vpop.permute.xlu0 %838
        %840 = vrot.lane.b32.xlu0 %v827, 32
        %v841 = vpop.permute.xlu0 %840
        %842 = vrot.lane.b32.xlu0 %v831, 32
        %v843 = vpop.permute.xlu0 %842
        %v844 = vsel %vm225, %v837, %v839
        %v845 = vsel %vm225, %v839, %v841
        %v846 = vsel %vm225, %v841, %v843
        %v852 = vmul.f32 %v753, %v837
        %v853 = vmul.f32 %v754, %v844
        %v854 = vmul.f32 %v755, %v845
        %v855 = vmul.f32 %v756, %v846
        %v856 = vmul.f32 %v814, %v843
        %v857 = vmul.f32 %v757, %v837
        %v858 = vmul.f32 %v758, %v844
        %v859 = vmul.f32 %v759, %v845
        %v860 = vmul.f32 %v760, %v846
        %v861 = vmul.f32 %v815, %v843
        %v872 = vrot.slane %v852, 2
        %v873 = vrot.slane %v857, 2
        %v874 = vsel %vm793, %v872, %v873
        %v875 = vrot.slane %v853, 2
        %v876 = vrot.slane %v858, 2
        %v877 = vsel %vm793, %v875, %v876
        %v878 = vrot.slane %v854, 2
        %v879 = vrot.slane %v859, 2
        %v880 = vsel %vm793, %v878, %v879
        %v881 = vrot.slane %v855, 2
        %v882 = vrot.slane %v860, 2
        %v883 = vsel %vm793, %v881, %v882
        %v884 = vrot.slane %v856, 2
        %v885 = vrot.slane %v861, 2
        %v886 = vsel %vm793, %v884, %v885
        %887 = vrot.lane.b32.xlu0 %v874, 96
        %v888 = vpop.permute.xlu0 %887
        %889 = vrot.lane.b32.xlu0 %v877, 96
        %v890 = vpop.permute.xlu0 %889
        %891 = vrot.lane.b32.xlu0 %v880, 96
        %v892 = vpop.permute.xlu0 %891
        %893 = vrot.lane.b32.xlu0 %v883, 96
        %v894 = vpop.permute.xlu0 %893
        %895 = vrot.lane.b32.xlu0 %v886, 96
        %v896 = vpop.permute.xlu0 %895
        %v897 = vsel %vm422, %v888, %v890
        %v898 = vsel %vm422, %v890, %v892
        %v899 = vsel %vm422, %v892, %v894
        %v900 = vsel %vm422, %v894, %v896
        %v905 = vadd.f32 %v810, %v897
        %v906 = vadd.f32 %v811, %v898
        %v907 = vadd.f32 %v812, %v899
        %v908 = vadd.f32 %v813, %v900
        %v909 = vlaneseq
        %v910 = vshrl.u32 %v909, 7
        %v911 = vsub.s32 0, %v910
        %v912 = vrot.slane %v336, %v911
        %v913 = vlaneseq
        %v914 = vshrl.u32 %v913, 7
        %v915 = vsub.s32 0, %v914
        %v916 = vrot.slane %v337, %v915
        %v917 = vlaneseq
        %v918 = vshrl.u32 %v917, 7
        %v919 = vsub.s32 0, %v918
        %v920 = vrot.slane %v338, %v919
        %v921 = vlaneseq
        %v922 = vshrl.u32 %v921, 7
        %v923 = vsub.s32 0, %v922
        %v924 = vrot.slane %v339, %v923
        %929 = vrot.lane.b32.xlu0 %v912, 64
        %v930 = vpop.permute.xlu0 %929
        %931 = vrot.lane.b32.xlu0 %v916, 64
        %v932 = vpop.permute.xlu0 %931
        %933 = vrot.lane.b32.xlu0 %v920, 64
        %v934 = vpop.permute.xlu0 %933
        %935 = vrot.lane.b32.xlu0 %v924, 64
        %v936 = vpop.permute.xlu0 %935
        %v937 = vsel %vm463, %v930, %v932
        %v938 = vsel %vm463, %v932, %v934
        %v939 = vsel %vm463, %v934, %v936
        %v945 = vmul.f32 %v753, %v930
        %v946 = vmul.f32 %v754, %v937
        %v947 = vmul.f32 %v755, %v938
        %v948 = vmul.f32 %v756, %v939
        %v949 = vmul.f32 %v814, %v936
        %v950 = vmul.f32 %v757, %v930
        %v951 = vmul.f32 %v758, %v937
        %v952 = vmul.f32 %v759, %v938
        %v953 = vmul.f32 %v760, %v939
        %v954 = vmul.f32 %v815, %v936
        %v965 = vrot.slane %v945, 2
        %v966 = vrot.slane %v950, 2
        %v967 = vsel %vm793, %v965, %v966
        %v968 = vrot.slane %v946, 2
        %v969 = vrot.slane %v951, 2
        %v970 = vsel %vm793, %v968, %v969
        %v971 = vrot.slane %v947, 2
        %v972 = vrot.slane %v952, 2
        %v973 = vsel %vm793, %v971, %v972
        %v974 = vrot.slane %v948, 2
        %v975 = vrot.slane %v953, 2
        %v976 = vsel %vm793, %v974, %v975
        %v977 = vrot.slane %v949, 2
        %v978 = vrot.slane %v954, 2
        %v979 = vsel %vm793, %v977, %v978
        %980 = vrot.lane.b32.xlu0 %v967, 64
        %v981 = vpop.permute.xlu0 %980
        %982 = vrot.lane.b32.xlu0 %v970, 64
        %v983 = vpop.permute.xlu0 %982
        %984 = vrot.lane.b32.xlu0 %v973, 64
        %v985 = vpop.permute.xlu0 %984
        %986 = vrot.lane.b32.xlu0 %v976, 64
        %v987 = vpop.permute.xlu0 %986
        %988 = vrot.lane.b32.xlu0 %v979, 64
        %v989 = vpop.permute.xlu0 %988
        %v990 = vsel %vm463, %v981, %v983
        %v991 = vsel %vm463, %v983, %v985
        %v992 = vsel %vm463, %v985, %v987
        %v993 = vsel %vm463, %v987, %v989
        %v998 = vadd.f32 %v905, %v990
        %v999 = vadd.f32 %v906, %v991
        %v1000 = vadd.f32 %v907, %v992
        %v1001 = vadd.f32 %v908, %v993
        %v1003 = vlaneseq
        %v1004 = vshrl.u32 %v1003, 7
        %v1005 = vsub.s32 0, %v1004
        %v1006 = vrot.slane %v340, %v1005
        %v1007 = vlaneseq
        %v1008 = vshrl.u32 %v1007, 7
        %v1009 = vsub.s32 1, %v1008
        %v1010 = vrot.slane %v340, %v1009
        %v1011 = vlaneseq
        %v1012 = vshrl.u32 %v1011, 7
        %v1013 = vsub.s32 2, %v1012
        %v1014 = vrot.slane %v340, %v1013
        %v1015 = vlaneseq
        %v1016 = vshrl.u32 %v1015, 7
        %v1017 = vsub.s32 3, %v1016
        %v1018 = vrot.slane %v340, %v1017
        %v1023 = vadd.f32 %v998, %v1006
        %v1024 = vadd.f32 %v999, %v1010
        %v1025 = vadd.f32 %v1000, %v1014
        %v1026 = vadd.f32 %v1001, %v1018
        %1027 = vst [vmem:[%s215] sm:$0xff] %v1023
        %1028 = vst [vmem:[%s215 + $0x8] sm:$0xff] %v1024
        %1029 = vst [vmem:[%s215 + $0x10] sm:$0xff] %v1025
        %1030 = vst [vmem:[%s215 + $0x18] sm:$0xff] %v1026
        %v1031 = vld [vmem:[#allocation2 + $0x28] sm:$0xff]
        %v1032 = vld [vmem:[#allocation2 + $0x30] sm:$0xff]
        %v1033 = vld [vmem:[#allocation2 + $0x38] sm:$0xff]
        %v1034 = vld [vmem:[#allocation2 + $0x40] sm:$0xff]
        %v1035 = vmul.f32 %v1031, %v348
        %v1036 = vmul.f32 %v1032, %v352
        %v1037 = vmul.f32 %v1033, %v356
        %v1038 = vmul.f32 %v1034, %v360
        %v1039 = vld [vmem:[#allocation2 + $0x48] sm:$0xff]
        %v1040 = vmul.f32 %v1031, %v387
        %v1041 = vmul.f32 %v1032, %v394
        %v1042 = vmul.f32 %v1033, %v395
        %v1043 = vmul.f32 %v1034, %v396
        %v1044 = vmul.f32 %v1039, %v393
        %1050 = vrot.lane.b32.xlu0 %v1040, 96
        %v1051 = vpop.permute.xlu0 %1050
        %1052 = vrot.lane.b32.xlu0 %v1041, 96
        %v1053 = vpop.permute.xlu0 %1052
        %1054 = vrot.lane.b32.xlu0 %v1042, 96
        %v1055 = vpop.permute.xlu0 %1054
        %1056 = vrot.lane.b32.xlu0 %v1043, 96
        %v1057 = vpop.permute.xlu0 %1056
        %1058 = vrot.lane.b32.xlu0 %v1044, 96
        %v1059 = vpop.permute.xlu0 %1058
        %v1060 = vsel %vm422, %v1051, %v1053
        %v1061 = vsel %vm422, %v1053, %v1055
        %v1062 = vsel %vm422, %v1055, %v1057
        %v1063 = vsel %vm422, %v1057, %v1059
        %v1068 = vadd.f32 %v1035, %v1060
        %v1069 = vadd.f32 %v1036, %v1061
        %v1070 = vadd.f32 %v1037, %v1062
        %v1071 = vadd.f32 %v1038, %v1063
        %v1072 = vmul.f32 %v1031, %v456
        %v1073 = vmul.f32 %v1032, %v464
        %v1074 = vmul.f32 %v1033, %v465
        %v1075 = vmul.f32 %v1034, %v466
        %v1076 = vmul.f32 %v1039, %v462
        %1082 = vrot.lane.b32.xlu0 %v1072, 64
        %v1083 = vpop.permute.xlu0 %1082
        %1084 = vrot.lane.b32.xlu0 %v1073, 64
        %v1085 = vpop.permute.xlu0 %1084
        %1086 = vrot.lane.b32.xlu0 %v1074, 64
        %v1087 = vpop.permute.xlu0 %1086
        %1088 = vrot.lane.b32.xlu0 %v1075, 64
        %v1089 = vpop.permute.xlu0 %1088
        %1090 = vrot.lane.b32.xlu0 %v1076, 64
        %v1091 = vpop.permute.xlu0 %1090
        %v1092 = vsel %vm463, %v1083, %v1085
        %v1093 = vsel %vm463, %v1085, %v1087
        %v1094 = vsel %vm463, %v1087, %v1089
        %v1095 = vsel %vm463, %v1089, %v1091
        %v1100 = vadd.f32 %v1068, %v1092
        %v1101 = vadd.f32 %v1069, %v1093
        %v1102 = vadd.f32 %v1070, %v1094
        %v1103 = vadd.f32 %v1071, %v1095
        %v1104 = vld [vmem:[#allocation2 + $0x28] sm:$0xfe]
        %v1105 = vld [vmem:[#allocation2 + $0x30] sm:$0xfe]
        %v1106 = vld [vmem:[#allocation2 + $0x38] sm:$0xfe]
        %v1107 = vld [vmem:[#allocation2 + $0x40] sm:$0xfe]
        %v1108 = vld [vmem:[#allocation2 + $0x50] sm:$0x1]
        %v1109 = vld [vmem:[#allocation2 + $0x58] sm:$0x1]
        %v1110 = vld [vmem:[#allocation2 + $0x60] sm:$0x1]
        %v1111 = vld [vmem:[#allocation2 + $0x68] sm:$0x1]
        %v1112 = vmul.f32 %v1104, %v515
        %v1113 = vmul.f32 %v1105, %v519
        %v1114 = vmul.f32 %v1106, %v523
        %v1115 = vmul.f32 %v1107, %v527
        %v1116 = vmul.f32 %v1108, %v515
        %v1117 = vmul.f32 %v1109, %v519
        %v1118 = vmul.f32 %v1110, %v523
        %v1119 = vmul.f32 %v1111, %v527
        %v1128 = vrot.slane %v1112, 1
        %v1129 = vrot.slane %v1116, 1
        %v1130 = vsel %vm544, %v1128, %v1129
        %v1131 = vrot.slane %v1113, 1
        %v1132 = vrot.slane %v1117, 1
        %v1133 = vsel %vm544, %v1131, %v1132
        %v1134 = vrot.slane %v1114, 1
        %v1135 = vrot.slane %v1118, 1
        %v1136 = vsel %vm544, %v1134, %v1135
        %v1137 = vrot.slane %v1115, 1
        %v1138 = vrot.slane %v1119, 1
        %v1139 = vsel %vm544, %v1137, %v1138
        %v1144 = vadd.f32 %v1100, %v1130
        %v1145 = vadd.f32 %v1101, %v1133
        %v1146 = vadd.f32 %v1102, %v1136
        %v1147 = vadd.f32 %v1103, %v1139
        %v1148 = vld [vmem:[#allocation2 + $0x48] sm:$0xfe]
        %v1149 = vld [vmem:[#allocation2 + $0x70] sm:$0x1]
        %v1150 = vmul.f32 %v1104, %v588
        %v1151 = vmul.f32 %v1105, %v595
        %v1152 = vmul.f32 %v1106, %v596
        %v1153 = vmul.f32 %v1107, %v597
        %v1154 = vmul.f32 %v1148, %v594
        %v1155 = vmul.f32 %v1108, %v588
        %v1156 = vmul.f32 %v1109, %v595
        %v1157 = vmul.f32 %v1110, %v596
        %v1158 = vmul.f32 %v1111, %v597
        %v1159 = vmul.f32 %v1149, %v594
        %v1170 = vrot.slane %v1150, 1
        %v1171 = vrot.slane %v1155, 1
        %v1172 = vsel %vm544, %v1170, %v1171
        %v1173 = vrot.slane %v1151, 1
        %v1174 = vrot.slane %v1156, 1
        %v1175 = vsel %vm544, %v1173, %v1174
        %v1176 = vrot.slane %v1152, 1
        %v1177 = vrot.slane %v1157, 1
        %v1178 = vsel %vm544, %v1176, %v1177
        %v1179 = vrot.slane %v1153, 1
        %v1180 = vrot.slane %v1158, 1
        %v1181 = vsel %vm544, %v1179, %v1180
        %v1182 = vrot.slane %v1154, 1
        %v1183 = vrot.slane %v1159, 1
        %v1184 = vsel %vm544, %v1182, %v1183
        %1185 = vrot.lane.b32.xlu0 %v1172, 96
        %v1186 = vpop.permute.xlu0 %1185
        %1187 = vrot.lane.b32.xlu0 %v1175, 96
        %v1188 = vpop.permute.xlu0 %1187
        %1189 = vrot.lane.b32.xlu0 %v1178, 96
        %v1190 = vpop.permute.xlu0 %1189
        %1191 = vrot.lane.b32.xlu0 %v1181, 96
        %v1192 = vpop.permute.xlu0 %1191
        %1193 = vrot.lane.b32.xlu0 %v1184, 96
        %v1194 = vpop.permute.xlu0 %1193
        %v1195 = vsel %vm422, %v1186, %v1188
        %v1196 = vsel %vm422, %v1188, %v1190
        %v1197 = vsel %vm422, %v1190, %v1192
        %v1198 = vsel %vm422, %v1192, %v1194
        %v1203 = vadd.f32 %v1144, %v1195
        %v1204 = vadd.f32 %v1145, %v1196
        %v1205 = vadd.f32 %v1146, %v1197
        %v1206 = vadd.f32 %v1147, %v1198
        %v1207 = vmul.f32 %v1104, %v681
        %v1208 = vmul.f32 %v1105, %v688
        %v1209 = vmul.f32 %v1106, %v689
        %v1210 = vmul.f32 %v1107, %v690
        %v1211 = vmul.f32 %v1148, %v687
        %v1212 = vmul.f32 %v1108, %v681
        %v1213 = vmul.f32 %v1109, %v688
        %v1214 = vmul.f32 %v1110, %v689
        %v1215 = vmul.f32 %v1111, %v690
        %v1216 = vmul.f32 %v1149, %v687
        %v1227 = vrot.slane %v1207, 1
        %v1228 = vrot.slane %v1212, 1
        %v1229 = vsel %vm544, %v1227, %v1228
        %v1230 = vrot.slane %v1208, 1
        %v1231 = vrot.slane %v1213, 1
        %v1232 = vsel %vm544, %v1230, %v1231
        %v1233 = vrot.slane %v1209, 1
        %v1234 = vrot.slane %v1214, 1
        %v1235 = vsel %vm544, %v1233, %v1234
        %v1236 = vrot.slane %v1210, 1
        %v1237 = vrot.slane %v1215, 1
        %v1238 = vsel %vm544, %v1236, %v1237
        %v1239 = vrot.slane %v1211, 1
        %v1240 = vrot.slane %v1216, 1
        %v1241 = vsel %vm544, %v1239, %v1240
        %1242 = vrot.lane.b32.xlu0 %v1229, 64
        %v1243 = vpop.permute.xlu0 %1242
        %1244 = vrot.lane.b32.xlu0 %v1232, 64
        %v1245 = vpop.permute.xlu0 %1244
        %1246 = vrot.lane.b32.xlu0 %v1235, 64
        %v1247 = vpop.permute.xlu0 %1246
        %1248 = vrot.lane.b32.xlu0 %v1238, 64
        %v1249 = vpop.permute.xlu0 %1248
        %1250 = vrot.lane.b32.xlu0 %v1241, 64
        %v1251 = vpop.permute.xlu0 %1250
        %v1252 = vsel %vm463, %v1243, %v1245
        %v1253 = vsel %vm463, %v1245, %v1247
        %v1254 = vsel %vm463, %v1247, %v1249
        %v1255 = vsel %vm463, %v1249, %v1251
        %v1260 = vadd.f32 %v1203, %v1252
        %v1261 = vadd.f32 %v1204, %v1253
        %v1262 = vadd.f32 %v1205, %v1254
        %v1263 = vadd.f32 %v1206, %v1255
        %v1264 = vld [vmem:[#allocation2 + $0x28] sm:$0xfc]
        %v1265 = vld [vmem:[#allocation2 + $0x30] sm:$0xfc]
        %v1266 = vld [vmem:[#allocation2 + $0x38] sm:$0xfc]
        %v1267 = vld [vmem:[#allocation2 + $0x40] sm:$0xfc]
        %v1268 = vld [vmem:[#allocation2 + $0x50] sm:$0x3]
        %v1269 = vld [vmem:[#allocation2 + $0x58] sm:$0x3]
        %v1270 = vld [vmem:[#allocation2 + $0x60] sm:$0x3]
        %v1271 = vld [vmem:[#allocation2 + $0x68] sm:$0x3]
        %v1272 = vmul.f32 %v1264, %v764
        %v1273 = vmul.f32 %v1265, %v768
        %v1274 = vmul.f32 %v1266, %v772
        %v1275 = vmul.f32 %v1267, %v776
        %v1276 = vmul.f32 %v1268, %v764
        %v1277 = vmul.f32 %v1269, %v768
        %v1278 = vmul.f32 %v1270, %v772
        %v1279 = vmul.f32 %v1271, %v776
        %v1288 = vrot.slane %v1272, 2
        %v1289 = vrot.slane %v1276, 2
        %v1290 = vsel %vm793, %v1288, %v1289
        %v1291 = vrot.slane %v1273, 2
        %v1292 = vrot.slane %v1277, 2
        %v1293 = vsel %vm793, %v1291, %v1292
        %v1294 = vrot.slane %v1274, 2
        %v1295 = vrot.slane %v1278, 2
        %v1296 = vsel %vm793, %v1294, %v1295
        %v1297 = vrot.slane %v1275, 2
        %v1298 = vrot.slane %v1279, 2
        %v1299 = vsel %vm793, %v1297, %v1298
        %v1304 = vadd.f32 %v1260, %v1290
        %v1305 = vadd.f32 %v1261, %v1293
        %v1306 = vadd.f32 %v1262, %v1296
        %v1307 = vadd.f32 %v1263, %v1299
        %v1308 = vld [vmem:[#allocation2 + $0x48] sm:$0xfc]
        %v1309 = vld [vmem:[#allocation2 + $0x70] sm:$0x3]
        %v1310 = vmul.f32 %v1264, %v837
        %v1311 = vmul.f32 %v1265, %v844
        %v1312 = vmul.f32 %v1266, %v845
        %v1313 = vmul.f32 %v1267, %v846
        %v1314 = vmul.f32 %v1308, %v843
        %v1315 = vmul.f32 %v1268, %v837
        %v1316 = vmul.f32 %v1269, %v844
        %v1317 = vmul.f32 %v1270, %v845
        %v1318 = vmul.f32 %v1271, %v846
        %v1319 = vmul.f32 %v1309, %v843
        %v1330 = vrot.slane %v1310, 2
        %v1331 = vrot.slane %v1315, 2
        %v1332 = vsel %vm793, %v1330, %v1331
        %v1333 = vrot.slane %v1311, 2
        %v1334 = vrot.slane %v1316, 2
        %v1335 = vsel %vm793, %v1333, %v1334
        %v1336 = vrot.slane %v1312, 2
        %v1337 = vrot.slane %v1317, 2
        %v1338 = vsel %vm793, %v1336, %v1337
        %v1339 = vrot.slane %v1313, 2
        %v1340 = vrot.slane %v1318, 2
        %v1341 = vsel %vm793, %v1339, %v1340
        %v1342 = vrot.slane %v1314, 2
        %v1343 = vrot.slane %v1319, 2
        %v1344 = vsel %vm793, %v1342, %v1343
        %1345 = vrot.lane.b32.xlu0 %v1332, 96
        %v1346 = vpop.permute.xlu0 %1345
        %1347 = vrot.lane.b32.xlu0 %v1335, 96
        %v1348 = vpop.permute.xlu0 %1347
        %1349 = vrot.lane.b32.xlu0 %v1338, 96
        %v1350 = vpop.permute.xlu0 %1349
        %1351 = vrot.lane.b32.xlu0 %v1341, 96
        %v1352 = vpop.permute.xlu0 %1351
        %1353 = vrot.lane.b32.xlu0 %v1344, 96
        %v1354 = vpop.permute.xlu0 %1353
        %v1355 = vsel %vm422, %v1346, %v1348
        %v1356 = vsel %vm422, %v1348, %v1350
        %v1357 = vsel %vm422, %v1350, %v1352
        %v1358 = vsel %vm422, %v1352, %v1354
        %v1363 = vadd.f32 %v1304, %v1355
        %v1364 = vadd.f32 %v1305, %v1356
        %v1365 = vadd.f32 %v1306, %v1357
        %v1366 = vadd.f32 %v1307, %v1358
        %v1367 = vmul.f32 %v1264, %v930
        %v1368 = vmul.f32 %v1265, %v937
        %v1369 = vmul.f32 %v1266, %v938
        %v1370 = vmul.f32 %v1267, %v939
        %v1371 = vmul.f32 %v1308, %v936
        %v1372 = vmul.f32 %v1268, %v930
        %v1373 = vmul.f32 %v1269, %v937
        %v1374 = vmul.f32 %v1270, %v938
        %v1375 = vmul.f32 %v1271, %v939
        %v1376 = vmul.f32 %v1309, %v936
        %v1387 = vrot.slane %v1367, 2
        %v1388 = vrot.slane %v1372, 2
        %v1389 = vsel %vm793, %v1387, %v1388
        %v1390 = vrot.slane %v1368, 2
        %v1391 = vrot.slane %v1373, 2
        %v1392 = vsel %vm793, %v1390, %v1391
        %v1393 = vrot.slane %v1369, 2
        %v1394 = vrot.slane %v1374, 2
        %v1395 = vsel %vm793, %v1393, %v1394
        %v1396 = vrot.slane %v1370, 2
        %v1397 = vrot.slane %v1375, 2
        %v1398 = vsel %vm793, %v1396, %v1397
        %v1399 = vrot.slane %v1371, 2
        %v1400 = vrot.slane %v1376, 2
        %v1401 = vsel %vm793, %v1399, %v1400
        %1402 = vrot.lane.b32.xlu0 %v1389, 64
        %v1403 = vpop.permute.xlu0 %1402
        %1404 = vrot.lane.b32.xlu0 %v1392, 64
        %v1405 = vpop.permute.xlu0 %1404
        %1406 = vrot.lane.b32.xlu0 %v1395, 64
        %v1407 = vpop.permute.xlu0 %1406
        %1408 = vrot.lane.b32.xlu0 %v1398, 64
        %v1409 = vpop.permute.xlu0 %1408
        %1410 = vrot.lane.b32.xlu0 %v1401, 64
        %v1411 = vpop.permute.xlu0 %1410
        %v1412 = vsel %vm463, %v1403, %v1405
        %v1413 = vsel %vm463, %v1405, %v1407
        %v1414 = vsel %vm463, %v1407, %v1409
        %v1415 = vsel %vm463, %v1409, %v1411
        %v1420 = vadd.f32 %v1363, %v1412
        %v1421 = vadd.f32 %v1364, %v1413
        %v1422 = vadd.f32 %v1365, %v1414
        %v1423 = vadd.f32 %v1366, %v1415
        %v1424 = vadd.f32 %v1420, %v1006
        %v1425 = vadd.f32 %v1421, %v1010
        %v1426 = vadd.f32 %v1422, %v1014
        %v1427 = vadd.f32 %v1423, %v1018
        %1428 = vst [vmem:[%s215 + $0x20] sm:$0xff] %v1424
        %1429 = vst [vmem:[%s215 + $0x28] sm:$0xff] %v1425
        %1430 = vst [vmem:[%s215 + $0x30] sm:$0xff] %v1426
        %1431 = vst [vmem:[%s215 + $0x38] sm:$0xff] %v1427
        %s1432 = sand.u32 %s97, 1
        %s1433 = scalar_lea.sflag [#allocation5], %s1432
        %s1434 = sand.u32 %s97, 1
        %s1435 = smul.addr %s1434, 64
        %s1436 = scalar_lea.vmem [#allocation9], %s1435
        // Predicated region
        $region45: #{tpu_custom_call.1} parent=31 // pred_check
          %p1437 = pneg %p107
        $region46: #{tpu_custom_call.1} parent=31 // pred_check_branch
          %1439 = sbr.rel (%p1437) target = $region48
        $region47: #{tpu_custom_call.1} parent=31 // pred_region
          %s1441 = ssub.s32 1024, 1024
          %1442 = vsyncadd %s1433, %s1441
          %s1443 = smul.addr %s21, 8
          %s1444 = smul.addr %s1443, 128
          %s1445 = scalar_lea.hbm %s3, %s1444
          %s1446 = sshll.u32 %s1436, 4
          %s1447 = int_to_ptr.vmem [resolvable:$true] %s1446
          %1452 = dma.vmem_to_hbm [thread:$0]  %s1447, 1024, %s1445, %s1433, 512, 512, 32
        $region48: #{tpu_custom_call.1} parent=31 // pred_fallthru
          _
      $region32: #{tpu_custom_call.1} parent=5 // pred_fallthru
        _
      %p1453 = scmp.le.s32.totalorder 2, %s16
      // Predicated region
      $region49: #{tpu_custom_call.1} parent=5 // pred_check
        %p1454 = pneg %p1453
      $region50: #{tpu_custom_call.1} parent=5 // pred_check_branch
        %1456 = sbr.rel (%p1454) target = $region52
      $region51: #{tpu_custom_call.1} parent=5 // pred_region
        %s1457 = ssub.s32 %s16, 2
        // Predicated region
        $region53: #{tpu_custom_call.1} parent=51 // pred_check
          %p1458 = pneg %p113
        $region54: #{tpu_custom_call.1} parent=51 // pred_check_branch
          %1460 = sbr.rel (%p1458) target = $region56
        $region55: #{tpu_custom_call.1} parent=51 // pred_region
          %s1461 = sand.u32 %s98, 1
          %s1462 = scalar_lea.sflag [#allocation5], %s1461
          %s1463 = sand.u32 %s98, 1
          %s1464 = smul.addr %s1463, 64
          %s1465 = scalar_lea.vmem [#allocation9], %s1464
          %1466 = dma.done %s1462, 1024
        $region56: #{tpu_custom_call.1} parent=51 // pred_fallthru
          _
      $region52: #{tpu_custom_call.1} parent=5 // pred_fallthru
        _
    $region6: #{tpu_custom_call.1} parent=1 // loop_footer
      %s20 = sadd.s32 1, %s16
    $region7: #{tpu_custom_call.1} parent=1 // loop_footer_branch
      %15 = sbr.rel target = $region3
    $region8: #{tpu_custom_call.1} parent=1 // loop_exit
      _
    %1467 = vsyncpa [#allocation4], 1
    %s1468 = scalar_lea.sflag [#allocation4], 1
    %1469 = vsyncpa %s1468, 1
    %1470 = vsyncpa [#allocation7], 1
    %1471 = vsyncpa [#allocation5], 1
    %s1472 = scalar_lea.sflag [#allocation5], 1
    %1473 = vsyncpa %s1472, 1

</llo_original>
